<compile_context>
chip_gen: v7x
topology: tpu7x:2x2x1
jax: 0.10.0
libtpu: 0.0.40
codegen_flags: <defaults>
</compile_context>

<pallas_src>
import jax
import jax.numpy as jnp
from jax import lax
from jax.experimental import pallas as pl
from jax.experimental.pallas import tpu as pltpu


def _round_up(x, m):
    return (x + m - 1) // m * m


# ----------------------------- fused kernel ----------------------------------
def _conv_scale_kernel(p_ref, w1_ref, att_ref, out_ref):
    """One (batch, spatial-tile) grid step: out = (patches @ W1) * att.

    p_ref  : (1, TM, 9*Cin)  im2col patch tile (compute dtype)
    w1_ref : (9*Cin, Cp)     fused 3x3 weights, lane-dense N = Cp
    att_ref: (1, 8, Cp) f32  precomputed sigmoid attention (rows identical)
    out_ref: (1, TM, Cp)     scaled conv output tile
    """
    feat = jnp.dot(p_ref[0], w1_ref[...], preferred_element_type=jnp.float32)
    att = att_ref[...][0, 0:1, :]                       # (1, Cp) f32
    out_ref[0] = (feat * att).astype(out_ref.dtype)


def _pick_tile(M, K, Cp, compute_itemsize, out_itemsize, *,
               target=512, budget_bytes=40 << 20):
    """Pick spatial tile tm (multiple of 8, prefers divisors of M so no spatial
    padding copy is needed), capped so the double-buffered working set fits."""
    fixed = 2 * K * Cp * compute_itemsize + 2 * 8 * Cp * 4       # w1 + att bufs
    per_tm = 2 * K * compute_itemsize + 2 * Cp * out_itemsize    # patch + out
    avail = max(budget_bytes - fixed, per_tm * 8)
    tm_cap = max(8, (avail // per_tm) // 8 * 8)
    tgt = max(8, min(target, tm_cap))
    for d in range(tgt, 7, -8):        # largest multiple-of-8 divisor of M <= tgt
        if M % d == 0:
            return d, M, fixed + per_tm * d
    tm = max(8, min(tgt, _round_up(M, 8)))
    return tm, _round_up(M, tm), fixed + per_tm * tm


# ----------------------------- wrappers ---------------------------------------
def attention_refinement_module_nhwc(x_nhwc, w_conv3x3, w_conv1x1, *,
                                     tm_target=512,
                                     compute_dtype=jnp.bfloat16,
                                     out_dtype=None):
    """NHWC-native ARM forward.

    x_nhwc: (N, H, W, Cin); w_conv3x3: (Cout, Cin, 3, 3);
    w_conv1x1: (Cout, Cout, 1, 1)."""
    N, H, W, Cin = x_nhwc.shape
    Cout = w_conv3x3.shape[0]
    if out_dtype is None:
        out_dtype = x_nhwc.dtype
    K = 9 * Cin
    Cp = _round_up(Cout, 128)            # lane-dense channel axis
    M = H * W

    tm, Mp, needed = _pick_tile(M, K, Cp,
                                jnp.dtype(compute_dtype).itemsize,
                                jnp.dtype(out_dtype).itemsize,
                                target=tm_target)
    n_tiles = Mp // tm
    vmem_limit = int(min(max(needed + (4 << 20), 16 << 20), 60 << 20))

    # ---- weights (tiny, once per call) ----------------------------------------
    # (Cout, Cin, 3, 3) -> (kh, kw, Cin, Cout) -> (9*Cin, Cout)
    w1_f32 = jnp.transpose(w_conv3x3, (2, 3, 1, 0)).reshape(K, Cout)
    w1_f32 = w1_f32.astype(jnp.float32)
    w1 = w1_f32
    if Cp != Cout:
        w1 = jnp.pad(w1, ((0, 0), (0, Cp - Cout)))      # zero cols -> padded feat = 0
    w1 = w1.astype(compute_dtype)
    w2 = w_conv1x1[:, :, 0, 0].astype(jnp.float32)      # (Cout_o, Cout_i)

    # ---- attention precompute (exact, f32, plain XLA prologue) ----------------
    xs = x_nhwc.astype(jnp.float32)
    tot = jnp.sum(xs, axis=(1, 2))                       # (N, Cin)
    row0 = jnp.sum(xs[:, 0], axis=1)                     # first row sums
    rowL = jnp.sum(xs[:, H - 1], axis=1)                 # last row sums
    col0 = jnp.sum(xs[:, :, 0], axis=1)                  # first col sums
    colL = jnp.sum(xs[:, :, W - 1], axis=1)              # last col sums
    c00, c0L = xs[:, 0, 0], xs[:, 0, W - 1]
    cL0, cLL = xs[:, H - 1, 0], xs[:, H - 1, W - 1]
    taps = []
    for kh in range(3):
        for kw in range(3):
            s = tot
            if kh == 0:
                s = s - rowL
            elif kh == 2:
                s = s - row0
            if kw == 0:
                s = s - colL
            elif kw == 2:
                s = s - col0
            if kh == 0 and kw == 0:
                s = s + cLL
            elif kh == 0 and kw == 2:
                s = s + cL0
            elif kh == 2 and kw == 0:
                s = s + c0L
            elif kh == 2 and kw == 2:
                s = s + c00
            taps.append(s)
    s_flat = jnp.stack(taps, axis=1).reshape(N, K)              # (N, 9*Cin)
    gap = (s_flat @ w1_f32) * (1.0 / float(M))                  # (N, Cout)
    att = jax.nn.sigmoid(gap @ w2.T)                            # (N, Cout)
    if Cp != Cout:
        att = jnp.pad(att, ((0, 0), (0, Cp - Cout)))
    att = jnp.broadcast_to(att.reshape(N, 1, Cp),
                           (N, 8, Cp)).astype(jnp.float32)      # (N, 8, Cp)

    # ---- im2col patches --------------------------------------------------------
    # TODO(synk): replace with haloed in-kernel DMA for Cin >~ 256 (see header).
    xp = jnp.pad(x_nhwc.astype(compute_dtype),
                 ((0, 0), (1, 1), (1, 1), (0, 0)))
    patches = jnp.concatenate(
        [xp[:, kh:kh + H, kw:kw + W, :] for kh in range(3) for kw in range(3)],
        axis=-1).reshape(N, M, K)
    if Mp != M:
        patches = jnp.pad(patches, ((0, 0), (0, Mp - M), (0, 0)))

    # ---- fused conv3x3 * attention sweep (single pass, fully parallel) --------
    out = pl.pallas_call(
        _conv_scale_kernel,
        out_shape=jax.ShapeDtypeStruct((N, Mp, Cp), out_dtype),
        grid_spec=pltpu.PrefetchScalarGridSpec(
            num_scalar_prefetch=0,
            grid=(N, n_tiles),
            in_specs=[
                pl.BlockSpec((1, tm, K), lambda b, t: (b, t, 0)),
                pl.BlockSpec((K, Cp), lambda b, t: (0, 0)),
                pl.BlockSpec((1, 8, Cp), lambda b, t: (b, 0, 0)),
            ],
            out_specs=pl.BlockSpec((1, tm, Cp), lambda b, t: (b, t, 0)),
        ),
        compiler_params=pltpu.CompilerParams(
            dimension_semantics=("parallel", "parallel"),
            vmem_limit_bytes=vmem_limit),
    )(patches, w1, att)

    if Mp != M:
        out = out[:, :M]
    if Cp != Cout:
        out = out[..., :Cout]
    return out.reshape(N, H, W, Cout)


def attention_refinement_module(x_nchw, w_conv3x3, w_conv1x1, **kwargs):
    """PyTorch-convention NCHW wrapper. Prefer the NHWC entry point above when
    the surrounding model is already channel-last (skips two HBM transposes)."""
    x_nhwc = jnp.transpose(x_nchw, (0, 2, 3, 1))
    out_nhwc = attention_refinement_module_nhwc(x_nhwc, w_conv3x3, w_conv1x1,
                                                **kwargs)
    return jnp.transpose(out_nhwc, (0, 3, 1, 2))


# ----------------------------- reference --------------------------------------
def _reference(x_nchw, w_conv3x3, w_conv1x1):
    feat = lax.conv_general_dilated(
        x_nchw, w_conv3x3, window_strides=(1, 1), padding=((1, 1), (1, 1)),
        dimension_numbers=("NCHW", "OIHW", "NCHW"))
    atten = jnp.mean(feat, axis=(2, 3), keepdims=True)
    atten = lax.conv_general_dilated(
        atten, w_conv1x1, window_strides=(1, 1), padding=((0, 0), (0, 0)),
        dimension_numbers=("NCHW", "OIHW", "NCHW"))
    atten = jax.nn.sigmoid(atten)
    return feat * atten


if __name__ == "__main__":
    key = jax.random.PRNGKey(0)
    k_x, k_w1, k_w2 = jax.random.split(key, 3)

    N, Cin, Cout, H, W = 2, 4, 8, 16, 16
    x = jax.random.normal(k_x, (N, Cin, H, W), jnp.float32)
    w_conv3x3 = jax.random.normal(k_w1, (Cout, Cin, 3, 3), jnp.float32) * 0.1
    w_conv1x1 = jax.random.normal(k_w2, (Cout, Cout, 1, 1), jnp.float32) * 0.1

    ref = _reference(x, w_conv3x3, w_conv1x1)

    # f32 compute path: validates kernel structure + attention precompute tightly.
    out_f32 = jax.block_until_ready(
        attention_refinement_module(x, w_conv3x3, w_conv1x1,
                                    compute_dtype=jnp.float32))
    assert out_f32.shape == ref.shape == (N, Cout, H, W)
    assert jnp.allclose(out_f32, ref, rtol=1e-3, atol=1e-3), "f32 mismatch"

    # Default bf16 compute path (attention stays exact f32; conv is bf16->f32 acc).
    out_bf16 = jax.block_until_ready(
        attention_refinement_module(x, w_conv3x3, w_conv1x1))
    assert out_bf16.shape == (N, Cout, H, W)
    assert jnp.allclose(out_bf16, ref, rtol=2e-2, atol=2e-2), "bf16 mismatch"

    print("KERNEL_OK")
</pallas_src>

<mosaic_0001>
module attributes {stable_mosaic.version = 11 : i64} {
  func.func @_conv_scale_kernel(%arg0: i32, %arg1: i32, %arg2: memref<1x256x36xf32, #tpu.memory_space<vmem>>, %arg3: memref<36x128xf32, #tpu.memory_space<vmem>>, %arg4: memref<1x8x128xf32, #tpu.memory_space<vmem>>, %arg5: memref<1x256x128xf32, #tpu.memory_space<vmem>>) attributes {dimension_semantics = [#tpu.dimension_semantics<parallel>, #tpu.dimension_semantics<parallel>], iteration_bounds = array<i64: 2, 1>, scalar_prefetch = 0 : i64, scratch_operands = 0 : i64, tpu.core_type = #tpu.core_type<tc>, window_params = [{transform_indices = @transform_0, window_bounds = array<i64: 1, 256, 36>}, {pipeline_mode = #tpu.pipeline_mode<synchronous>, transform_indices = @transform_1, window_bounds = array<i64: 36, 128>}, {transform_indices = @transform_2, window_bounds = array<i64: 1, 8, 128>}, {transform_indices = @transform_3, window_bounds = array<i64: 1, 256, 128>}]} {
    %c0 = arith.constant 0 : index
    %c0_0 = arith.constant 0 : index
    %c0_1 = arith.constant 0 : index
    %0 = vector.load %arg2[%c0, %c0_0, %c0_1] : memref<1x256x36xf32, #tpu.memory_space<vmem>>, vector<1x256x36xf32>
    %1 = vector.shape_cast %0 : vector<1x256x36xf32> to vector<256x36xf32>
    %c0_2 = arith.constant 0 : index
    %c0_3 = arith.constant 0 : index
    %2 = vector.load %arg3[%c0_2, %c0_3] : memref<36x128xf32, #tpu.memory_space<vmem>>, vector<36x128xf32>
    %cst = arith.constant dense<0.000000e+00> : vector<256x128xf32>
    %3 = tpu.matmul %1, %2, %cst {dimension_numbers = #tpu.dot_dimension_numbers<[1], [0], [0], [1], [0, 0, 1, 1], [], []>} : vector<256x36xf32>, vector<36x128xf32>, vector<256x128xf32> -> vector<256x128xf32>
    %c0_4 = arith.constant 0 : index
    %c0_5 = arith.constant 0 : index
    %c0_6 = arith.constant 0 : index
    %4 = vector.load %arg4[%c0_4, %c0_5, %c0_6] : memref<1x8x128xf32, #tpu.memory_space<vmem>>, vector<1x8x128xf32>
    %5 = vector.extract_strided_slice %4 {offsets = [0, 0, 0], sizes = [1, 1, 128], strides = [1, 1, 1]} : vector<1x8x128xf32> to vector<1x1x128xf32>
    %6 = vector.shape_cast %5 : vector<1x1x128xf32> to vector<1x128xf32>
    %7 = vector.broadcast %6 : vector<1x128xf32> to vector<256x128xf32>
    %8 = arith.mulf %3, %7 : vector<256x128xf32>
    %c0_7 = arith.constant 0 : index
    %c0_8 = arith.constant 0 : index
    %c0_9 = arith.constant 0 : index
    %9 = vector.load %arg5[%c0_7, %c0_8, %c0_9] : memref<1x256x128xf32, #tpu.memory_space<vmem>>, vector<1x256x128xf32>
    %10 = vector.shape_cast %9 : vector<1x256x128xf32> to vector<256x128xf32>
    %11 = vector.shape_cast %8 : vector<256x128xf32> to vector<1x256x128xf32>
    tpu.vector_store %arg5[%c0_7, %c0_8, %c0_9], %11 {strides = array<i32>} : memref<1x256x128xf32, #tpu.memory_space<vmem>>, vector<1x256x128xf32>,
    return
  }
  func.func @transform_0(%arg0: i32, %arg1: i32) -> (i32, i32, i32) {
    %c0_i32 = arith.constant 0 : i32
    %c0_i32_0 = arith.constant 0 : i32
    return %arg0, %arg1, %c0_i32 : i32, i32, i32
  }
  func.func @transform_1(%arg0: i32, %arg1: i32) -> (i32, i32) {
    %c0_i32 = arith.constant 0 : i32
    %c0_i32_0 = arith.constant 0 : i32
    %c0_i32_1 = arith.constant 0 : i32
    return %c0_i32, %c0_i32_0 : i32, i32
  }
  func.func @transform_2(%arg0: i32, %arg1: i32) -> (i32, i32, i32) {
    %c0_i32 = arith.constant 0 : i32
    %c0_i32_0 = arith.constant 0 : i32
    %c0_i32_1 = arith.constant 0 : i32
    return %arg0, %c0_i32, %c0_i32_0 : i32, i32, i32
  }
  func.func @transform_3(%arg0: i32, %arg1: i32) -> (i32, i32, i32) {
    %c0_i32 = arith.constant 0 : i32
    %c0_i32_0 = arith.constant 0 : i32
    return %arg0, %arg1, %c0_i32 : i32, i32, i32
  }
}

</mosaic_0001>

<llo_original>
// kernel: tpu_custom_call.1
$region0: #{tpu_custom_call.1}
  #allocation0 [shape = 'u32[]', space=smem, size = 0x4, offset = 0x4, fixed_abs, tag = 'smem constant byte address 0x4 - core index']
  #allocation1 [shape = 'u32[144,128]{1,0:T(1,128)}', space=vmem, size = 0x12000, scoped, tag = 'internal scratch']
  %s0 = inlined_call_operand.vmem [shape: f32[2,256,36], index: 0, kind: input, shape index: {}]
  %s1 = inlined_call_operand.vmem [shape: f32[36,128], index: 1, kind: input, shape index: {}]
  %s2 = inlined_call_operand.vmem [shape: f32[2,8,128], index: 2, kind: input, shape index: {}]
  %s3 = inlined_call_operand.hbm [shape: f32[2,256,128], index: 3, kind: output, shape index: {}]
  %s4 = sld [smem:[#allocation0]]
  $region45: #{tpu_custom_call.1} parent=0
    _
  %s6 = ssub.s32 1, %s4
  %s7 = scalar_select 0, %s6, %s4
  $region1: #{tpu_custom_call.1} parent=0
    #allocation2 [shape = 'u8[262144]{0}', space=vmem, size = 0x40000, scoped, tag = 'output window, operand 0']
    #allocation3 [shape = 's32[2]{0}', space=sflag, size = 0x8, scoped, tag = 'scoped memory for tpu_custom_call.1']
    %8 = vsyncpa [#allocation3], 0
    %s9 = scalar_lea.sflag [#allocation3], 1
    %10 = vsyncpa %s9, 0
    loop: start=0, step=1, limit=4
    $region2: #{tpu_custom_call.1} parent=1 // loop_pre_header
      _
    $region3: #{tpu_custom_call.1} parent=1 // loop_header
      %s12 = sphi 0, %s16
      %p13 = scmp.ge.s32.totalorder %s12, 4
      %s19 = sphi 0, %s31
      %s20 = sphi 0, %s27
      %s21 = sphi 0, %s19
      %s22 = sphi 0, %s20
      %s23 = sphi 0, %s21
      %s24 = sphi 0, %s22
      %s36 = sphi 0, %s38
      %s39 = sphi 0, %s36
      %s40 = sphi 0, %s39
      %s56 = sphi 0, %s40
      %s60 = sphi 0, %s60
      %s62 = sphi 0, %s60
      %s63 = sphi 0, %s62
      %s77 = sphi 0, %s63
      %s83 = sphi 0, %s85
      %s86 = sphi 0, %s83
      %s87 = sphi 0, %s86
      %s103 = sphi 0, %s87
      %s111 = sphi 0, %s113
      %s114 = sphi 0, %s111
      %s115 = sphi 0, %s114
      %s131 = sphi 0, %s115
    $region4: #{tpu_custom_call.1} parent=1 // loop_header_branch
      %15 = sbr.rel (%p13) target = $region8
    $region5: #{tpu_custom_call.1} parent=1 // loop_body
      %s17 = ssub.s32 %s12, 1
      %s18 = ssub.s32 %s12, 2
      %s25 = sadd.s32 1, %s20
      %p26 = scmp.ge.s32.totalorder %s25, 1
      %s27 = scalar_select %p26, 0, %s25
      %s28 = sadd.s32 1, %s19
      %s29 = scalar_select %p26, %s28, %s19
      %p30 = scmp.ge.s32.totalorder %s29, 2
      %s31 = scalar_select %p30, 0, %s29
      %s32 = ssub.s32 %s19, %s31
      %s33 = ssub.s32 %s20, %s27
      %s34 = sor.u32 %s32, %s33
      %p35 = scmp.eq.s32.totalorder %s34, 0
      %s37 = sadd.s32 %s36, 1
      %s38 = scalar_select %p35, %s36, %s37
      %p41 = pneg %p35
      %p42 = scmp.eq.s32.totalorder %s12, 1
      %p43 = por %p41, %p42
      %p44 = scmp.ne.s32.totalorder %s36, %s39
      %p45 = scmp.eq.s32.totalorder %s12, 0
      %p46 = por %p44, %p45
      %p47 = scmp.ne.s32.totalorder %s36, %s39
      %p48 = scmp.eq.s32.totalorder %s17, 1
      %p49 = por %p47, %p48
      %p50 = scmp.ne.s32.totalorder %s39, %s40
      %p51 = scmp.eq.s32.totalorder %s17, 0
      %p52 = por %p50, %p51
      %p53 = scmp.ne.s32.totalorder %s39, %s40
      %p54 = scmp.eq.s32.totalorder %s18, 1
      %p55 = por %p53, %p54
      %p57 = scmp.ne.s32.totalorder %s40, %s56
      %p58 = scmp.eq.s32.totalorder %s18, 0
      %p59 = por %p57, %p58
      %s61 = sadd.s32 %s60, 1
      %p64 = scmp.eq.s32.totalorder %s12, 1
      %p65 = scmp.ne.s32.totalorder %s60, %s62
      %p66 = scmp.eq.s32.totalorder %s12, 0
      %p67 = por %p65, %p66
      %p68 = scmp.ne.s32.totalorder %s60, %s62
      %p69 = scmp.eq.s32.totalorder %s17, 1
      %p70 = por %p68, %p69
      %p71 = scmp.ne.s32.totalorder %s62, %s63
      %p72 = scmp.eq.s32.totalorder %s17, 0
      %p73 = por %p71, %p72
      %p74 = scmp.ne.s32.totalorder %s62, %s63
      %p75 = scmp.eq.s32.totalorder %s18, 1
      %p76 = por %p74, %p75
      %p78 = scmp.ne.s32.totalorder %s63, %s77
      %p79 = scmp.eq.s32.totalorder %s18, 0
      %p80 = por %p78, %p79
      %s81 = ssub.s32 %s19, %s31
      %p82 = scmp.eq.s32.totalorder %s81, 0
      %s84 = sadd.s32 %s83, 1
      %s85 = scalar_select %p82, %s83, %s84
      %p88 = pneg %p82
      %p89 = scmp.eq.s32.totalorder %s12, 1
      %p90 = por %p88, %p89
      %p91 = scmp.ne.s32.totalorder %s83, %s86
      %p92 = scmp.eq.s32.totalorder %s12, 0
      %p93 = por %p91, %p92
      %p94 = scmp.ne.s32.totalorder %s83, %s86
      %p95 = scmp.eq.s32.totalorder %s17, 1
      %p96 = por %p94, %p95
      %p97 = scmp.ne.s32.totalorder %s86, %s87
      %p98 = scmp.eq.s32.totalorder %s17, 0
      %p99 = por %p97, %p98
      %p100 = scmp.ne.s32.totalorder %s86, %s87
      %p101 = scmp.eq.s32.totalorder %s18, 1
      %p102 = por %p100, %p101
      %p104 = scmp.ne.s32.totalorder %s87, %s103
      %p105 = scmp.eq.s32.totalorder %s18, 0
      %p106 = por %p104, %p105
      %s107 = ssub.s32 %s19, %s31
      %s108 = ssub.s32 %s20, %s27
      %s109 = sor.u32 %s107, %s108
      %p110 = scmp.eq.s32.totalorder %s109, 0
      %s112 = sadd.s32 %s111, 1
      %s113 = scalar_select %p110, %s111, %s112
      %p116 = pneg %p110
      %p117 = scmp.eq.s32.totalorder %s12, 1
      %p118 = por %p116, %p117
      %p119 = scmp.ne.s32.totalorder %s111, %s114
      %p120 = scmp.eq.s32.totalorder %s12, 0
      %p121 = por %p119, %p120
      %p122 = scmp.ne.s32.totalorder %s111, %s114
      %p123 = scmp.eq.s32.totalorder %s17, 1
      %p124 = por %p122, %p123
      %p125 = scmp.ne.s32.totalorder %s114, %s115
      %p126 = scmp.eq.s32.totalorder %s17, 0
      %p127 = por %p125, %p126
      %p128 = scmp.ne.s32.totalorder %s114, %s115
      %p129 = scmp.eq.s32.totalorder %s18, 1
      %p130 = por %p128, %p129
      %p132 = scmp.ne.s32.totalorder %s115, %s131
      %p133 = scmp.eq.s32.totalorder %s18, 0
      %p134 = por %p132, %p133
      %p135 = scmp.le.s32.totalorder 1, %s12
      %p136 = scmp.lt.s32.totalorder %s12, 3
      %p137 = pnand %p135, %p136
      %p138 = pneg %p137
      // Predicated region
      $region9: #{tpu_custom_call.1} parent=5 // pred_check
        _
      $region10: #{tpu_custom_call.1} parent=5 // pred_check_branch
        %140 = sbr.rel (%p137) target = $region12
      $region11: #{tpu_custom_call.1} parent=5 // pred_region
        %s141 = ssub.s32 %s12, 1
        // Predicated region
        $region13: #{tpu_custom_call.1} parent=11 // pred_check
          %p142 = pneg %p73
        $region14: #{tpu_custom_call.1} parent=11 // pred_check_branch
          %144 = sbr.rel (%p142) target = $region16
        $region15: #{tpu_custom_call.1} parent=11 // pred_region
          _
        $region16: #{tpu_custom_call.1} parent=11 // pred_fallthru
          _
      $region12: #{tpu_custom_call.1} parent=5 // pred_fallthru
        _
      %p145 = scmp.lt.s32.totalorder %s12, 2
      // Predicated region
      $region17: #{tpu_custom_call.1} parent=5 // pred_check
        %p146 = pneg %p145
      $region18: #{tpu_custom_call.1} parent=5 // pred_check_branch
        %148 = sbr.rel (%p146) target = $region20
      $region19: #{tpu_custom_call.1} parent=5 // pred_region
        // Predicated region
        $region21: #{tpu_custom_call.1} parent=19 // pred_check
          %p149 = pneg %p46
        $region22: #{tpu_custom_call.1} parent=19 // pred_check_branch
          %151 = sbr.rel (%p149) target = $region24
        $region23: #{tpu_custom_call.1} parent=19 // pred_region
          %s152 = smul.u32 32, %s20
          %p153 = scmp.lt.s32.totalorder %s19, 1
          %s154 = scalar_select %p153, %s19, 1
          %p155 = scmp.lt.s32.totalorder %s152, 31
          %s156 = scalar_select %p155, %s152, 31
          %s157 = smul.addr %s154, 32
          %s158 = sadd.s32 %s156, %s157
          %s159 = smul.addr %s158, 8
          %s160 = scalar_lea.vmem %s0, %s159
          %s161 = smul.u32 32, %s20
        $region24: #{tpu_custom_call.1} parent=19 // pred_fallthru
          _
        // Predicated region
        $region25: #{tpu_custom_call.1} parent=19 // pred_check
          %p162 = pneg %p93
        $region26: #{tpu_custom_call.1} parent=19 // pred_check_branch
          %164 = sbr.rel (%p162) target = $region28
        $region27: #{tpu_custom_call.1} parent=19 // pred_region
          %p165 = scmp.lt.s32.totalorder %s19, 1
          %s166 = scalar_select %p165, %s19, 1
          %s167 = smul.addr %s166, 8
          %s168 = scalar_lea.vmem %s2, %s167
        $region28: #{tpu_custom_call.1} parent=19 // pred_fallthru
          _
      $region20: #{tpu_custom_call.1} parent=5 // pred_fallthru
        _
      %p169 = scmp.le.s32.totalorder 1, %s12
      %p170 = scmp.lt.s32.totalorder %s12, 3
      %p171 = pnand %p169, %p170
      %p172 = pneg %p171
      // Predicated region
      $region29: #{tpu_custom_call.1} parent=5 // pred_check
        _
      $region30: #{tpu_custom_call.1} parent=5 // pred_check_branch
        %174 = sbr.rel (%p171) target = $region32
      $region31: #{tpu_custom_call.1} parent=5 // pred_region
        %s175 = ssub.s32 %s12, 1
        %s176 = smul.u32 32, %s22
        %p177 = scmp.lt.s32.totalorder %s21, 1
        %s178 = scalar_select %p177, %s21, 1
        %p179 = scmp.lt.s32.totalorder %s176, 31
        %s180 = scalar_select %p179, %s176, 31
        %s181 = smul.addr %s178, 32
        %s182 = sadd.s32 %s180, %s181
        %s183 = smul.addr %s182, 8
        %s184 = scalar_lea.vmem %s0, %s183
        %p185 = pneg %p52
        %p186 = pneg %p49
        %p187 = pneg %p73
        %p188 = pneg %p70
        %p189 = scmp.lt.s32.totalorder %s21, 1
        %s190 = scalar_select %p189, %s21, 1
        %s191 = smul.addr %s190, 8
        %s192 = scalar_lea.vmem %s2, %s191
        %p193 = pneg %p99
        %p194 = pneg %p96
        %p195 = pneg %p127
        %p196 = pneg %p124
        %s197 = sand.u32 %s114, 1
        %s198 = scalar_lea.sflag [#allocation3], %s197
        %s199 = sand.u32 %s114, 1
        %s200 = smul.addr %s199, 256
        %s201 = scalar_lea.vmem [#allocation2], %s200
        %s202 = smul.u32 32, %s22
        %p203 = scmp.lt.s32.totalorder %s21, 1
        %s204 = scalar_select %p203, %s21, 1
        %p205 = scmp.lt.s32.totalorder %s202, 31
        %s206 = scalar_select %p205, %s202, 31
        %s207 = smul.addr %s204, 32
        %s208 = sadd.s32 %s206, %s207
        %s209 = smul.addr %s208, 8
        %s210 = scalar_lea.vmem %s0, %s209
        %s211 = smul.u32 32, %s22
        %p212 = scmp.lt.s32.totalorder %s21, 1
        %s213 = scalar_select %p212, %s21, 1
        %s214 = smul.addr %s213, 8
        %s215 = scalar_lea.vmem %s2, %s214
        %s216 = smul.u32 32, %s22
        %v217 = vld [vmem:[%s210] sm:$0xff]
        %v218 = vld [vmem:[%s210 + $0x8] sm:$0xff]
        %v219 = vld [vmem:[%s210 + $0x10] sm:$0xff]
        %v220 = vld [vmem:[%s210 + $0x18] sm:$0xff]
        %v221 = vld [vmem:[%s210 + $0x20] sm:$0xff]
        %v222 = vld [vmem:[%s210 + $0x28] sm:$0xff]
        %v223 = vld [vmem:[%s210 + $0x30] sm:$0xff]
        %v224 = vld [vmem:[%s210 + $0x38] sm:$0xff]
        %v225 = vld [vmem:[%s210 + $0x40] sm:$0xff]
        %v226 = vld [vmem:[%s210 + $0x48] sm:$0xff]
        %v227 = vld [vmem:[%s210 + $0x50] sm:$0xff]
        %v228 = vld [vmem:[%s210 + $0x58] sm:$0xff]
        %v229 = vld [vmem:[%s210 + $0x60] sm:$0xff]
        %v230 = vld [vmem:[%s210 + $0x68] sm:$0xff]
        %v231 = vld [vmem:[%s210 + $0x70] sm:$0xff]
        %v232 = vld [vmem:[%s210 + $0x78] sm:$0xff]
        %v233 = vld [vmem:[%s210 + $0x80] sm:$0xff]
        %v234 = vld [vmem:[%s210 + $0x88] sm:$0xff]
        %v235 = vld [vmem:[%s210 + $0x90] sm:$0xff]
        %v236 = vld [vmem:[%s210 + $0x98] sm:$0xff]
        %v237 = vld [vmem:[%s210 + $0xa0] sm:$0xff]
        %v238 = vld [vmem:[%s210 + $0xa8] sm:$0xff]
        %v239 = vld [vmem:[%s210 + $0xb0] sm:$0xff]
        %v240 = vld [vmem:[%s210 + $0xb8] sm:$0xff]
        %v241 = vld [vmem:[%s210 + $0xc0] sm:$0xff]
        %v242 = vld [vmem:[%s210 + $0xc8] sm:$0xff]
        %v243 = vld [vmem:[%s210 + $0xd0] sm:$0xff]
        %v244 = vld [vmem:[%s210 + $0xd8] sm:$0xff]
        %v245 = vld [vmem:[%s210 + $0xe0] sm:$0xff]
        %v246 = vld [vmem:[%s210 + $0xe8] sm:$0xff]
        %v247 = vld [vmem:[%s210 + $0xf0] sm:$0xff]
        %v248 = vld [vmem:[%s210 + $0xf8] sm:$0xff]
        %v249 = vld [vmem:[%s1] sm:$0xff]
        %v250 = vld [vmem:[%s1 + $0x8] sm:$0xff]
        %v251 = vld [vmem:[%s1 + $0x10] sm:$0xff]
        %v252 = vld [vmem:[%s1 + $0x18] sm:$0xff]
        %v253 = vld [vmem:[%s1 + $0x20] sm:$0xf]
        %vm254 = vcmask 293888
        %v256 = vsel %vm254, %v217, 0
        %v259 = vsel %vm254, %v218, 0
        %v262 = vsel %vm254, %v219, 0
        %v265 = vsel %vm254, %v220, 0
        %v268 = vsel %vm254, %v221, 0
        %v271 = vsel %vm254, %v222, 0
        %v274 = vsel %vm254, %v223, 0
        %v277 = vsel %vm254, %v224, 0
        %v280 = vsel %vm254, %v225, 0
        %v283 = vsel %vm254, %v226, 0
        %v286 = vsel %vm254, %v227, 0
        %v289 = vsel %vm254, %v228, 0
        %v292 = vsel %vm254, %v229, 0
        %v295 = vsel %vm254, %v230, 0
        %v298 = vsel %vm254, %v231, 0
        %v301 = vsel %vm254, %v232, 0
        %v304 = vsel %vm254, %v233, 0
        %v307 = vsel %vm254, %v234, 0
        %v310 = vsel %vm254, %v235, 0
        %v313 = vsel %vm254, %v236, 0
        %v316 = vsel %vm254, %v237, 0
        %v319 = vsel %vm254, %v238, 0
        %v322 = vsel %vm254, %v239, 0
        %v325 = vsel %vm254, %v240, 0
        %v328 = vsel %vm254, %v241, 0
        %v331 = vsel %vm254, %v242, 0
        %v334 = vsel %vm254, %v243, 0
        %v337 = vsel %vm254, %v244, 0
        %v340 = vsel %vm254, %v245, 0
        %v343 = vsel %vm254, %v246, 0
        %v346 = vsel %vm254, %v247, 0
        %v349 = vsel %vm254, %v248, 0
        %vm351 = vcmask 1043456
        %v353 = vsel %vm351, %v253, 0
        %355 = vmatprep.subr.mxu0 0.0
        %356 = vmatpush1.msra.mxu0 %v249
        %357 = vmatprep.subr.mxu0 0.0
        %358 = vmatpush1.msra.mxu0 %v250
        %359 = vmatprep.subr.mxu0 0.0
        %360 = vmatpush1.msra.mxu0 %v251
        %361 = vmatprep.subr.mxu0 0.0
        %362 = vmatpush1.msra.mxu0 %v252
        %363 = vmatprep.subr.mxu0 0.0
        %364 = vmatpush1.msra.mxu0 %v353
        %365 = vmatprep.subr.mxu0 0.0
        %366 = vmatpush1.msra.mxu0 0.0
        %367 = vmatprep.subr.mxu0 0.0
        %368 = vmatpush1.msra.mxu0 0.0
        %369 = vmatprep.subr.mxu0 0.0
        %370 = vmatpush1.msra.mxu0 0.0
        %371 = vmatprep.subr.mxu0 0.0
        %372 = vmatpush1.msra.mxu0 0.0
        %373 = vmatprep.subr.mxu0 0.0
        %374 = vmatpush1.msra.mxu0 0.0
        %375 = vmatprep.subr.mxu0 0.0
        %376 = vmatpush1.msra.mxu0 0.0
        %377 = vmatprep.subr.mxu0 0.0
        %378 = vmatpush1.msra.mxu0 0.0
        %379 = vmatprep.subr.mxu0 0.0
        %380 = vmatpush1.msra.mxu0 0.0
        %381 = vmatprep.subr.mxu0 0.0
        %382 = vmatpush1.msra.mxu0 0.0
        %383 = vmatprep.subr.mxu0 0.0
        %384 = vmatpush1.msra.mxu0 0.0
        %385 = vmatprep.subr.mxu0 0.0
        %386 = vmatpush1.msra.mxu0 0.0
        %387 = vmatprep.subr.mxu0 0.0
        %388 = vmatpush1.msra.mxu0 0.0
        %389 = vmatprep.subr.mxu0 0.0
        %390 = vmatpush1.msra.mxu0 0.0
        %391 = vmatprep.subr.mxu0 0.0
        %392 = vmatpush1.msra.mxu0 0.0
        %393 = vmatprep.subr.mxu0 0.0
        %394 = vmatpush1.msra.mxu0 0.0
        %395 = vmatprep.subr.mxu0 0.0
        %396 = vmatpush1.msra.mxu0 0.0
        %397 = vmatprep.subr.mxu0 0.0
        %398 = vmatpush1.msra.mxu0 0.0
        %399 = vmatprep.subr.mxu0 0.0
        %400 = vmatpush1.msra.mxu0 0.0
        %401 = vmatprep.subr.mxu0 0.0
        %402 = vmatpush1.msra.mxu0 0.0
        %403 = vmatprep.subr.mxu0 0.0
        %404 = vmatpush1.msra.mxu0 0.0
        %405 = vmatprep.subr.mxu0 0.0
        %406 = vmatpush1.msra.mxu0 0.0
        %407 = vmatprep.subr.mxu0 0.0
        %408 = vmatpush1.msra.mxu0 0.0
        %409 = vmatprep.subr.mxu0 0.0
        %410 = vmatpush1.msra.mxu0 0.0
        %411 = vmatprep.subr.mxu0 0.0
        %412 = vmatpush1.msra.mxu0 0.0
        %413 = vmatprep.subr.mxu0 0.0
        %414 = vmatpush1.msra.mxu0 0.0
        %415 = vmatprep.subr.mxu0 0.0
        %416 = vmatpush1.msra.mxu0 0.0
        %417 = vmatprep.subr.mxu0 0.0
        %418 = vmatpush1.msra.mxu0 0.0
        %419 = vmatprep.mubr.f32.mxu0 0.0
        %420 = vmatmul.mubr.f32.gmra.mrb[0].mxu0 %v256
        %v421 = vpop.f32.mrb[0].mxu0
        %v422 = vadd.f32 0.0, %v421
        %v423 = vpop.f32.mrb[0].mxu0
        %424 = vmatprep.mubr.f32.mxu0 0.0
        %425 = vmatmul.mubr.f32.gmra.mrb[0].mxu0 %v259
        %v426 = vpop.f32.mrb[0].mxu0
        %v427 = vadd.f32 0.0, %v426
        %v428 = vpop.f32.mrb[0].mxu0
        %429 = vmatprep.mubr.f32.mxu0 0.0
        %430 = vmatmul.mubr.f32.gmra.mrb[0].mxu0 %v262
        %v431 = vpop.f32.mrb[0].mxu0
        %v432 = vadd.f32 0.0, %v431
        %v433 = vpop.f32.mrb[0].mxu0
        %434 = vmatprep.mubr.f32.mxu0 0.0
        %435 = vmatmul.mubr.f32.gmra.mrb[0].mxu0 %v265
        %v436 = vpop.f32.mrb[0].mxu0
        %v437 = vadd.f32 0.0, %v436
        %v438 = vpop.f32.mrb[0].mxu0
        %439 = vmatprep.mubr.f32.mxu0 0.0
        %440 = vmatmul.mubr.f32.gmra.mrb[0].mxu0 %v268
        %v441 = vpop.f32.mrb[0].mxu0
        %v442 = vadd.f32 0.0, %v441
        %v443 = vpop.f32.mrb[0].mxu0
        %444 = vmatprep.mubr.f32.mxu0 0.0
        %445 = vmatmul.mubr.f32.gmra.mrb[0].mxu0 %v271
        %v446 = vpop.f32.mrb[0].mxu0
        %v447 = vadd.f32 0.0, %v446
        %v448 = vpop.f32.mrb[0].mxu0
        %449 = vmatprep.mubr.f32.mxu0 0.0
        %450 = vmatmul.mubr.f32.gmra.mrb[0].mxu0 %v274
        %v451 = vpop.f32.mrb[0].mxu0
        %v452 = vadd.f32 0.0, %v451
        %v453 = vpop.f32.mrb[0].mxu0
        %454 = vmatprep.mubr.f32.mxu0 0.0
        %455 = vmatmul.mubr.f32.gmra.mrb[0].mxu0 %v277
        %v456 = vpop.f32.mrb[0].mxu0
        %v457 = vadd.f32 0.0, %v456
        %v458 = vpop.f32.mrb[0].mxu0
        %459 = vmatprep.mubr.f32.mxu0 0.0
        %460 = vmatmul.mubr.f32.gmra.mrb[0].mxu0 %v280
        %v461 = vpop.f32.mrb[0].mxu0
        %v462 = vadd.f32 0.0, %v461
        %v463 = vpop.f32.mrb[0].mxu0
        %464 = vmatprep.mubr.f32.mxu0 0.0
        %465 = vmatmul.mubr.f32.gmra.mrb[0].mxu0 %v283
        %v466 = vpop.f32.mrb[0].mxu0
        %v467 = vadd.f32 0.0, %v466
        %v468 = vpop.f32.mrb[0].mxu0
        %469 = vmatprep.mubr.f32.mxu0 0.0
        %470 = vmatmul.mubr.f32.gmra.mrb[0].mxu0 %v286
        %v471 = vpop.f32.mrb[0].mxu0
        %v472 = vadd.f32 0.0, %v471
        %v473 = vpop.f32.mrb[0].mxu0
        %474 = vmatprep.mubr.f32.mxu0 0.0
        %475 = vmatmul.mubr.f32.gmra.mrb[0].mxu0 %v289
        %v476 = vpop.f32.mrb[0].mxu0
        %v477 = vadd.f32 0.0, %v476
        %v478 = vpop.f32.mrb[0].mxu0
        %479 = vmatprep.mubr.f32.mxu0 0.0
        %480 = vmatmul.mubr.f32.gmra.mrb[0].mxu0 %v292
        %v481 = vpop.f32.mrb[0].mxu0
        %v482 = vadd.f32 0.0, %v481
        %v483 = vpop.f32.mrb[0].mxu0
        %484 = vmatprep.mubr.f32.mxu0 0.0
        %485 = vmatmul.mubr.f32.gmra.mrb[0].mxu0 %v295
        %v486 = vpop.f32.mrb[0].mxu0
        %v487 = vadd.f32 0.0, %v486
        %v488 = vpop.f32.mrb[0].mxu0
        %489 = vmatprep.mubr.f32.mxu0 0.0
        %490 = vmatmul.mubr.f32.gmra.mrb[0].mxu0 %v298
        %v491 = vpop.f32.mrb[0].mxu0
        %v492 = vadd.f32 0.0, %v491
        %v493 = vpop.f32.mrb[0].mxu0
        %494 = vmatprep.mubr.f32.mxu0 0.0
        %495 = vmatmul.mubr.f32.gmra.mrb[0].mxu0 %v301
        %v496 = vpop.f32.mrb[0].mxu0
        %v497 = vadd.f32 0.0, %v496
        %v498 = vpop.f32.mrb[0].mxu0
        %499 = vmatprep.mubr.f32.mxu0 0.0
        %500 = vmatmul.mubr.f32.gmra.mrb[0].mxu0 %v304
        %v501 = vpop.f32.mrb[0].mxu0
        %v502 = vadd.f32 0.0, %v501
        %v503 = vpop.f32.mrb[0].mxu0
        %504 = vmatprep.mubr.f32.mxu0 0.0
        %505 = vmatmul.mubr.f32.gmra.mrb[0].mxu0 %v307
        %v506 = vpop.f32.mrb[0].mxu0
        %v507 = vadd.f32 0.0, %v506
        %v508 = vpop.f32.mrb[0].mxu0
        %509 = vmatprep.mubr.f32.mxu0 0.0
        %510 = vmatmul.mubr.f32.gmra.mrb[0].mxu0 %v310
        %v511 = vpop.f32.mrb[0].mxu0
        %v512 = vadd.f32 0.0, %v511
        %v513 = vpop.f32.mrb[0].mxu0
        %514 = vmatprep.mubr.f32.mxu0 0.0
        %515 = vmatmul.mubr.f32.gmra.mrb[0].mxu0 %v313
        %v516 = vpop.f32.mrb[0].mxu0
        %v517 = vadd.f32 0.0, %v516
        %v518 = vpop.f32.mrb[0].mxu0
        %519 = vmatprep.mubr.f32.mxu0 0.0
        %520 = vmatmul.mubr.f32.gmra.mrb[0].mxu0 %v316
        %v521 = vpop.f32.mrb[0].mxu0
        %v522 = vadd.f32 0.0, %v521
        %v523 = vpop.f32.mrb[0].mxu0
        %524 = vmatprep.mubr.f32.mxu0 0.0
        %525 = vmatmul.mubr.f32.gmra.mrb[0].mxu0 %v319
        %v526 = vpop.f32.mrb[0].mxu0
        %v527 = vadd.f32 0.0, %v526
        %v528 = vpop.f32.mrb[0].mxu0
        %529 = vmatprep.mubr.f32.mxu0 0.0
        %530 = vmatmul.mubr.f32.gmra.mrb[0].mxu0 %v322
        %v531 = vpop.f32.mrb[0].mxu0
        %v532 = vadd.f32 0.0, %v531
        %v533 = vpop.f32.mrb[0].mxu0
        %534 = vmatprep.mubr.f32.mxu0 0.0
        %535 = vmatmul.mubr.f32.gmra.mrb[0].mxu0 %v325
        %v536 = vpop.f32.mrb[0].mxu0
        %v537 = vadd.f32 0.0, %v536
        %v538 = vpop.f32.mrb[0].mxu0
        %539 = vmatprep.mubr.f32.mxu0 0.0
        %540 = vmatmul.mubr.f32.gmra.mrb[0].mxu0 %v328
        %v541 = vpop.f32.mrb[0].mxu0
        %v542 = vadd.f32 0.0, %v541
        %v543 = vpop.f32.mrb[0].mxu0
        %544 = vmatprep.mubr.f32.mxu0 0.0
        %545 = vmatmul.mubr.f32.gmra.mrb[0].mxu0 %v331
        %v546 = vpop.f32.mrb[0].mxu0
        %v547 = vadd.f32 0.0, %v546
        %v548 = vpop.f32.mrb[0].mxu0
        %549 = vmatprep.mubr.f32.mxu0 0.0
        %550 = vmatmul.mubr.f32.gmra.mrb[0].mxu0 %v334
        %v551 = vpop.f32.mrb[0].mxu0
        %v552 = vadd.f32 0.0, %v551
        %v553 = vpop.f32.mrb[0].mxu0
        %554 = vmatprep.mubr.f32.mxu0 0.0
        %555 = vmatmul.mubr.f32.gmra.mrb[0].mxu0 %v337
        %v556 = vpop.f32.mrb[0].mxu0
        %v557 = vadd.f32 0.0, %v556
        %v558 = vpop.f32.mrb[0].mxu0
        %559 = vmatprep.mubr.f32.mxu0 0.0
        %560 = vmatmul.mubr.f32.gmra.mrb[0].mxu0 %v340
        %v561 = vpop.f32.mrb[0].mxu0
        %v562 = vadd.f32 0.0, %v561
        %v563 = vpop.f32.mrb[0].mxu0
        %564 = vmatprep.mubr.f32.mxu0 0.0
        %565 = vmatmul.mubr.f32.gmra.mrb[0].mxu0 %v343
        %v566 = vpop.f32.mrb[0].mxu0
        %v567 = vadd.f32 0.0, %v566
        %v568 = vpop.f32.mrb[0].mxu0
        %569 = vmatprep.mubr.f32.mxu0 0.0
        %570 = vmatmul.mubr.f32.gmra.mrb[0].mxu0 %v346
        %v571 = vpop.f32.mrb[0].mxu0
        %v572 = vadd.f32 0.0, %v571
        %v573 = vpop.f32.mrb[0].mxu0
        %574 = vmatprep.mubr.f32.mxu0 0.0
        %575 = vmatmul.mubr.f32.gmra.mrb[0].mxu0 %v349
        %v576 = vpop.f32.mrb[0].mxu0
        %v577 = vadd.f32 0.0, %v576
        %v578 = vpop.f32.mrb[0].mxu0
        %579 = vdwg.mxu0
        %v580 = vld [vmem:[%s215] sm:$0xff]
        %v581 = vlaneseq
        %v582 = vshrl.u32 %v581, 7
        %v583 = vsub.s32 0, %v582
        %v584 = vrot.slane %v580, %v583
        %v585 = vmul.f32 %v422, %v584
        %v586 = vmul.f32 %v427, %v584
        %v587 = vmul.f32 %v432, %v584
        %v588 = vmul.f32 %v437, %v584
        %v589 = vmul.f32 %v442, %v584
        %v590 = vmul.f32 %v447, %v584
        %v591 = vmul.f32 %v452, %v584
        %v592 = vmul.f32 %v457, %v584
        %v593 = vmul.f32 %v462, %v584
        %v594 = vmul.f32 %v467, %v584
        %v595 = vmul.f32 %v472, %v584
        %v596 = vmul.f32 %v477, %v584
        %v597 = vmul.f32 %v482, %v584
        %v598 = vmul.f32 %v487, %v584
        %v599 = vmul.f32 %v492, %v584
        %v600 = vmul.f32 %v497, %v584
        %v601 = vmul.f32 %v502, %v584
        %v602 = vmul.f32 %v507, %v584
        %v603 = vmul.f32 %v512, %v584
        %v604 = vmul.f32 %v517, %v584
        %v605 = vmul.f32 %v522, %v584
        %v606 = vmul.f32 %v527, %v584
        %v607 = vmul.f32 %v532, %v584
        %v608 = vmul.f32 %v537, %v584
        %v609 = vmul.f32 %v542, %v584
        %v610 = vmul.f32 %v547, %v584
        %v611 = vmul.f32 %v552, %v584
        %v612 = vmul.f32 %v557, %v584
        %v613 = vmul.f32 %v562, %v584
        %v614 = vmul.f32 %v567, %v584
        %v615 = vmul.f32 %v572, %v584
        %v616 = vmul.f32 %v577, %v584
        %617 = vst [vmem:[%s201] sm:$0xff] %v585
        %618 = vst [vmem:[%s201 + $0x8] sm:$0xff] %v586
        %619 = vst [vmem:[%s201 + $0x10] sm:$0xff] %v587
        %620 = vst [vmem:[%s201 + $0x18] sm:$0xff] %v588
        %621 = vst [vmem:[%s201 + $0x20] sm:$0xff] %v589
        %622 = vst [vmem:[%s201 + $0x28] sm:$0xff] %v590
        %623 = vst [vmem:[%s201 + $0x30] sm:$0xff] %v591
        %624 = vst [vmem:[%s201 + $0x38] sm:$0xff] %v592
        %625 = vst [vmem:[%s201 + $0x40] sm:$0xff] %v593
        %626 = vst [vmem:[%s201 + $0x48] sm:$0xff] %v594
        %627 = vst [vmem:[%s201 + $0x50] sm:$0xff] %v595
        %628 = vst [vmem:[%s201 + $0x58] sm:$0xff] %v596
        %629 = vst [vmem:[%s201 + $0x60] sm:$0xff] %v597
        %630 = vst [vmem:[%s201 + $0x68] sm:$0xff] %v598
        %631 = vst [vmem:[%s201 + $0x70] sm:$0xff] %v599
        %632 = vst [vmem:[%s201 + $0x78] sm:$0xff] %v600
        %633 = vst [vmem:[%s201 + $0x80] sm:$0xff] %v601
        %634 = vst [vmem:[%s201 + $0x88] sm:$0xff] %v602
        %635 = vst [vmem:[%s201 + $0x90] sm:$0xff] %v603
        %636 = vst [vmem:[%s201 + $0x98] sm:$0xff] %v604
        %637 = vst [vmem:[%s201 + $0xa0] sm:$0xff] %v605
        %638 = vst [vmem:[%s201 + $0xa8] sm:$0xff] %v606
        %639 = vst [vmem:[%s201 + $0xb0] sm:$0xff] %v607
        %640 = vst [vmem:[%s201 + $0xb8] sm:$0xff] %v608
        %641 = vst [vmem:[%s201 + $0xc0] sm:$0xff] %v609
        %642 = vst [vmem:[%s201 + $0xc8] sm:$0xff] %v610
        %643 = vst [vmem:[%s201 + $0xd0] sm:$0xff] %v611
        %644 = vst [vmem:[%s201 + $0xd8] sm:$0xff] %v612
        %645 = vst [vmem:[%s201 + $0xe0] sm:$0xff] %v613
        %646 = vst [vmem:[%s201 + $0xe8] sm:$0xff] %v614
        %647 = vst [vmem:[%s201 + $0xf0] sm:$0xff] %v615
        %648 = vst [vmem:[%s201 + $0xf8] sm:$0xff] %v616
        %s649 = sand.u32 %s114, 1
        %s650 = scalar_lea.sflag [#allocation3], %s649
        %s651 = sand.u32 %s114, 1
        %s652 = smul.addr %s651, 256
        %s653 = scalar_lea.vmem [#allocation2], %s652
        // Predicated region
        $region33: #{tpu_custom_call.1} parent=31 // pred_check
          %p654 = pneg %p124
        $region34: #{tpu_custom_call.1} parent=31 // pred_check_branch
          %656 = sbr.rel (%p654) target = $region36
        $region35: #{tpu_custom_call.1} parent=31 // pred_region
          %s657 = smul.u32 32, %s22
          %s659 = ssub.s32 4096, 4096
          %660 = vsyncadd %s650, %s659
          %s661 = smul.addr %s21, 32
          %s662 = sadd.s32 %s657, %s661
          %s663 = smul.addr %s662, 128
          %s664 = scalar_lea.hbm %s3, %s663
          %s665 = sshll.u32 %s653, 4
          %s666 = int_to_ptr.vmem [resolvable:$true] %s665
          %671 = dma.vmem_to_hbm [thread:$0]  %s666, 4096, %s664, %s650, 128, 128, 8
        $region36: #{tpu_custom_call.1} parent=31 // pred_fallthru
          _
      $region32: #{tpu_custom_call.1} parent=5 // pred_fallthru
        _
      %p672 = scmp.le.s32.totalorder 2, %s12
      // Predicated region
      $region37: #{tpu_custom_call.1} parent=5 // pred_check
        %p673 = pneg %p672
      $region38: #{tpu_custom_call.1} parent=5 // pred_check_branch
        %675 = sbr.rel (%p673) target = $region40
      $region39: #{tpu_custom_call.1} parent=5 // pred_region
        %s676 = ssub.s32 %s12, 2
        // Predicated region
        $region41: #{tpu_custom_call.1} parent=39 // pred_check
          %p677 = pneg %p130
        $region42: #{tpu_custom_call.1} parent=39 // pred_check_branch
          %679 = sbr.rel (%p677) target = $region44
        $region43: #{tpu_custom_call.1} parent=39 // pred_region
          %s680 = sand.u32 %s115, 1
          %s681 = scalar_lea.sflag [#allocation3], %s680
          %s682 = sand.u32 %s115, 1
          %s683 = smul.addr %s682, 256
          %s684 = scalar_lea.vmem [#allocation2], %s683
          %685 = dma.done %s681, 4096
        $region44: #{tpu_custom_call.1} parent=39 // pred_fallthru
          _
      $region40: #{tpu_custom_call.1} parent=5 // pred_fallthru
        _
    $region6: #{tpu_custom_call.1} parent=1 // loop_footer
      %s16 = sadd.s32 1, %s12
    $region7: #{tpu_custom_call.1} parent=1 // loop_footer_branch
      %11 = sbr.rel target = $region3
    $region8: #{tpu_custom_call.1} parent=1 // loop_exit
      _
    %686 = vsyncpa [#allocation3], 1
    %s687 = scalar_lea.sflag [#allocation3], 1
    %688 = vsyncpa %s687, 1

</llo_original>
